<compile_context>
chip_gen: v6e
topology: v6e:2x2x1
jax: 0.10.0
libtpu: 0.0.40
codegen_flags: <defaults>
</compile_context>

<pallas_src>
import jax
import jax.numpy as jnp
from jax.experimental import pallas as pl
from jax.experimental.pallas import tpu as pltpu


def sdp_lipschitz_kernel(x_ref, wcn_ref, wt_ref, b_ref, o_ref):
    x = x_ref[...]                                                     # (tb, C)
    res = jnp.dot(x, wcn_ref[...],
                  preferred_element_type=jnp.float32) + b_ref[...]     # (tb, N)
    r = jnp.maximum(res, 0.0)                                          # ReLU
    out = x - jnp.dot(r, wt_ref[...],
                      preferred_element_type=jnp.float32)              # (tb, C)
    o_ref[...] = out.astype(o_ref.dtype)


def _pick_tb(B, target=1024):
    """Largest batch tile: full B for small batches, else a multiple-of-8 divisor."""
    if B <= target:
        return B
    for tb in range(min(target, B), 0, -1):
        if B % tb == 0 and tb % 8 == 0:
            return tb
    return B


def sdp_lipschitz_forward(x, weight, bias, q, *, tb=None):
    B, C = x.shape
    N = weight.shape[0]
    if tb is None:
        tb = _pick_tb(B)
    assert B % tb == 0, f"batch tile {tb} must divide batch {B}"

    # ---- grid-invariant precompute (hoisted out of the kernel) ----------------
    # t[i] = safe_inv( sum_j |exp(-q_i) * (W W^T)_ij * exp(q_j)| ); exp(±q) > 0,
    # so the abs factors exactly onto |W W^T|.
    hi = jax.lax.Precision.HIGHEST
    g = jnp.dot(weight, weight.T, precision=hi)                          # (N, N)
    t_raw = jnp.exp(-q) * jnp.dot(jnp.abs(g), jnp.exp(q), precision=hi)  # (N,)
    t = jnp.where(t_raw == 0.0, 0.0, 1.0 / t_raw)                        # safe_inv
    wt = (2.0 * t)[:, None] * weight                                     # (N, C): folds 2x and diag(t)
    w_cn = weight.T                                                      # (C, N): no in-kernel transpose

    return pl.pallas_call(
        sdp_lipschitz_kernel,
        out_shape=jax.ShapeDtypeStruct((B, C), x.dtype),
        grid_spec=pltpu.PrefetchScalarGridSpec(
            num_scalar_prefetch=0,
            grid=(B // tb,),
            in_specs=[
                pl.BlockSpec((tb, C), lambda i: (i, 0)),   # x: tiled over batch
                pl.BlockSpec((C, N), lambda i: (0, 0)),    # W^T: replicated
                pl.BlockSpec((N, C), lambda i: (0, 0)),    # 2*diag(t)@W: replicated
                pl.BlockSpec((1, N), lambda i: (0, 0)),    # bias: replicated
            ],
            out_specs=pl.BlockSpec((tb, C), lambda i: (i, 0)),
        ),
        compiler_params=pltpu.CompilerParams(
            dimension_semantics=("parallel",)),
    )(x, w_cn, wt, bias)


def reference_forward(x, weight, bias, q):
    hi = jax.lax.Precision.HIGHEST
    qe = jnp.exp(q)
    qi = jnp.exp(-q)
    g = jnp.dot(weight, weight.T, precision=hi)
    t_raw = jnp.sum(jnp.abs(qi[:, None] * g * qe[None, :]), axis=1)
    t = jnp.where(t_raw == 0.0, 0.0, 1.0 / t_raw)
    res = jnp.dot(x, weight.T, precision=hi) + bias
    res = t[None, :] * jax.nn.relu(res)
    res = 2.0 * jnp.dot(res, weight, precision=hi)
    return x - res


if __name__ == "__main__":
    B, CIN, INNER = 16, 32, 64

    key = jax.random.PRNGKey(0)
    kw, kb, kq, kx = jax.random.split(key, 4)

    # xavier_normal_ on (inner_dim, cin): std = sqrt(2 / (fan_in + fan_out))
    std = (2.0 / (CIN + INNER)) ** 0.5
    weight = std * jax.random.normal(kw, (INNER, CIN), dtype=jnp.float32)
    bound = 1.0 / (CIN ** 0.5)
    bias = jax.random.uniform(kb, (1, INNER), dtype=jnp.float32,
                              minval=-bound, maxval=bound)
    q = jax.random.normal(kq, (INNER,), dtype=jnp.float32)
    x = jax.random.normal(kx, (B, CIN), dtype=jnp.float32)

    out = sdp_lipschitz_forward(x, weight, bias, q)
    out = jax.block_until_ready(out)

    ref = reference_forward(x, weight, bias, q)
    assert out.shape == (B, CIN)
    assert jnp.allclose(out, ref, rtol=1e-3, atol=1e-3), (
        f"max abs err = {jnp.max(jnp.abs(out - ref))}")

    print("KERNEL_OK")
</pallas_src>

<mosaic_0001>
module attributes {stable_mosaic.version = 11 : i64} {
  func.func @sdp_lipschitz_kernel(%arg0: i32, %arg1: memref<16x32xf32, #tpu.memory_space<vmem>>, %arg2: memref<32x64xf32, #tpu.memory_space<vmem>>, %arg3: memref<64x32xf32, #tpu.memory_space<vmem>>, %arg4: memref<1x64xf32, #tpu.memory_space<vmem>>, %arg5: memref<16x32xf32, #tpu.memory_space<vmem>>) attributes {dimension_semantics = [#tpu.dimension_semantics<parallel>], iteration_bounds = array<i64: 1>, scalar_prefetch = 0 : i64, scratch_operands = 0 : i64, tpu.core_type = #tpu.core_type<tc>, window_params = [{transform_indices = @transform_0, window_bounds = array<i64: 16, 32>}, {pipeline_mode = #tpu.pipeline_mode<synchronous>, transform_indices = @transform_1, window_bounds = array<i64: 32, 64>}, {pipeline_mode = #tpu.pipeline_mode<synchronous>, transform_indices = @transform_2, window_bounds = array<i64: 64, 32>}, {pipeline_mode = #tpu.pipeline_mode<synchronous>, transform_indices = @transform_3, window_bounds = array<i64: 1, 64>}, {transform_indices = @transform_4, window_bounds = array<i64: 16, 32>}]} {
    %c0 = arith.constant 0 : index
    %c0_0 = arith.constant 0 : index
    %0 = vector.load %arg1[%c0, %c0_0] : memref<16x32xf32, #tpu.memory_space<vmem>>, vector<16x32xf32>
    %c0_1 = arith.constant 0 : index
    %c0_2 = arith.constant 0 : index
    %1 = vector.load %arg2[%c0_1, %c0_2] : memref<32x64xf32, #tpu.memory_space<vmem>>, vector<32x64xf32>
    %cst = arith.constant dense<0.000000e+00> : vector<16x64xf32>
    %2 = tpu.matmul %0, %1, %cst {dimension_numbers = #tpu.dot_dimension_numbers<[1], [0], [0], [1], [0, 0, 1, 1], [], []>} : vector<16x32xf32>, vector<32x64xf32>, vector<16x64xf32> -> vector<16x64xf32>
    %c0_3 = arith.constant 0 : index
    %c0_4 = arith.constant 0 : index
    %3 = vector.load %arg4[%c0_3, %c0_4] : memref<1x64xf32, #tpu.memory_space<vmem>>, vector<1x64xf32>
    %4 = vector.broadcast %3 : vector<1x64xf32> to vector<16x64xf32>
    %5 = arith.addf %2, %4 : vector<16x64xf32>
    %cst_5 = arith.constant 0.000000e+00 : f32
    %6 = vector.broadcast %cst_5 : f32 to vector<16x64xf32>
    %7 = arith.maximumf %5, %6 : vector<16x64xf32>
    %c0_6 = arith.constant 0 : index
    %c0_7 = arith.constant 0 : index
    %8 = vector.load %arg3[%c0_6, %c0_7] : memref<64x32xf32, #tpu.memory_space<vmem>>, vector<64x32xf32>
    %cst_8 = arith.constant dense<0.000000e+00> : vector<16x32xf32>
    %9 = tpu.matmul %7, %8, %cst_8 {dimension_numbers = #tpu.dot_dimension_numbers<[1], [0], [0], [1], [0, 0, 1, 1], [], []>} : vector<16x64xf32>, vector<64x32xf32>, vector<16x32xf32> -> vector<16x32xf32>
    %10 = arith.subf %0, %9 : vector<16x32xf32>
    %c0_9 = arith.constant 0 : index
    %c0_10 = arith.constant 0 : index
    %11 = vector.load %arg5[%c0_9, %c0_10] : memref<16x32xf32, #tpu.memory_space<vmem>>, vector<16x32xf32>
    tpu.vector_store %arg5[%c0_9, %c0_10], %10 {strides = array<i32>} : memref<16x32xf32, #tpu.memory_space<vmem>>, vector<16x32xf32>,
    return
  }
  func.func @transform_0(%arg0: i32) -> (i32, i32) {
    %c0_i32 = arith.constant 0 : i32
    %c0_i32_0 = arith.constant 0 : i32
    return %arg0, %c0_i32 : i32, i32
  }
  func.func @transform_1(%arg0: i32) -> (i32, i32) {
    %c0_i32 = arith.constant 0 : i32
    %c0_i32_0 = arith.constant 0 : i32
    %c0_i32_1 = arith.constant 0 : i32
    return %c0_i32, %c0_i32_0 : i32, i32
  }
  func.func @transform_2(%arg0: i32) -> (i32, i32) {
    %c0_i32 = arith.constant 0 : i32
    %c0_i32_0 = arith.constant 0 : i32
    %c0_i32_1 = arith.constant 0 : i32
    return %c0_i32, %c0_i32_0 : i32, i32
  }
  func.func @transform_3(%arg0: i32) -> (i32, i32) {
    %c0_i32 = arith.constant 0 : i32
    %c0_i32_0 = arith.constant 0 : i32
    %c0_i32_1 = arith.constant 0 : i32
    return %c0_i32, %c0_i32_0 : i32, i32
  }
  func.func @transform_4(%arg0: i32) -> (i32, i32) {
    %c0_i32 = arith.constant 0 : i32
    %c0_i32_0 = arith.constant 0 : i32
    return %arg0, %c0_i32 : i32, i32
  }
}

</mosaic_0001>

<llo_original>
// kernel: tpu_custom_call.1
$region0: #{tpu_custom_call.1}
  #allocation0 [shape = 'u32[]', space=smem, size = 0x4, offset = 0x4, fixed_abs, tag = 'smem constant byte address 0x4 - core index']
  #allocation1 [shape = 'u32[144,128]{1,0:T(1,128)}', space=vmem, size = 0x12000, scoped, tag = 'internal scratch']
  %s0 = inlined_call_operand.vmem [shape: f32[16,32], index: 0, kind: input, shape index: {}]
  %s1 = inlined_call_operand.vmem [shape: f32[32,64], index: 1, kind: input, shape index: {}]
  %s2 = inlined_call_operand.vmem [shape: f32[64,32], index: 2, kind: input, shape index: {}]
  %s3 = inlined_call_operand.vmem [shape: f32[1,64], index: 3, kind: input, shape index: {}]
  %s4 = inlined_call_operand.hbm [shape: f32[16,32], index: 4, kind: output, shape index: {}]
  %s5 = sld [smem:[#allocation0]]
  $region26: #{tpu_custom_call.1} parent=0
    _
  %s7 = ssub.s32 1, %s5
  %s8 = scalar_select 0, %s7, %s5
  $region1: #{tpu_custom_call.1} parent=0
    #allocation2 [shape = 'u8[8192]{0}', space=vmem, size = 0x2000, scoped, tag = 'output window, operand 0, single buffered']
    #allocation3 [shape = 's32[1]{0}', space=sflag, size = 0x4, scoped, tag = 'scoped memory for tpu_custom_call.1']
    %9 = vsyncpa [#allocation3], 0
    // Predicated region
    $region2: #{tpu_custom_call.1} parent=1 // pred_check
      _
    $region3: #{tpu_custom_call.1} parent=1 // pred_check_branch
      %11 = sbr.rel (0) target = $region5
    $region4: #{tpu_custom_call.1} parent=1 // pred_region
      _
    $region5: #{tpu_custom_call.1} parent=1 // pred_fallthru
      _
    // Predicated region
    $region6: #{tpu_custom_call.1} parent=1 // pred_check
      _
    $region7: #{tpu_custom_call.1} parent=1 // pred_check_branch
      %13 = sbr.rel (0) target = $region9
    $region8: #{tpu_custom_call.1} parent=1 // pred_region
      _
    $region9: #{tpu_custom_call.1} parent=1 // pred_fallthru
      _
    // Predicated region
    $region10: #{tpu_custom_call.1} parent=1 // pred_check
      _
    $region11: #{tpu_custom_call.1} parent=1 // pred_check_branch
      %15 = sbr.rel (0) target = $region13
    $region12: #{tpu_custom_call.1} parent=1 // pred_region
      _
    $region13: #{tpu_custom_call.1} parent=1 // pred_fallthru
      _
    // Predicated region
    $region14: #{tpu_custom_call.1} parent=1 // pred_check
      _
    $region15: #{tpu_custom_call.1} parent=1 // pred_check_branch
      %17 = sbr.rel (0) target = $region17
    $region16: #{tpu_custom_call.1} parent=1 // pred_region
      _
    $region17: #{tpu_custom_call.1} parent=1 // pred_fallthru
      _
    %v18 = vld [vmem:[%s0] sm:$0xff]
    %v19 = vld [vmem:[%s0 + $0x8] sm:$0xff]
    %v20 = vld [vmem:[%s1] sm:$0xff]
    %v21 = vld [vmem:[%s1 + $0x8] sm:$0xff]
    %v22 = vld [vmem:[%s1 + $0x10] sm:$0xff]
    %v23 = vld [vmem:[%s1 + $0x18] sm:$0xff]
    %v24 = vld [vmem:[%s3] sm:$0x1]
    %v26 = vlaneseq
    %v27 = vshrl.u32 %v26, 7
    %v28 = vsub.s32 0, %v27
    %v29 = vrot.slane %v24, %v28
    %vm31 = vcmask 261120
    %v33 = vsel %vm31, %v18, 0
    %v36 = vsel %vm31, %v19, 0
    %38 = vmatprep.subr.mxu0 0.0
    %39 = vmatpush1.msra.mxu0 0.0
    %40 = vmatprep.subr.mxu0 0.0
    %41 = vmatpush1.msra.mxu0 0.0
    %42 = vmatprep.subr.mxu0 0.0
    %43 = vmatpush1.msra.mxu0 0.0
    %44 = vmatprep.subr.mxu0 0.0
    %45 = vmatpush1.msra.mxu0 0.0
    %46 = vmatprep.subr.mxu0 0.0
    %47 = vmatpush1.msra.mxu0 0.0
    %48 = vmatprep.subr.mxu0 0.0
    %49 = vmatpush1.msra.mxu0 0.0
    %50 = vmatprep.subr.mxu0 0.0
    %51 = vmatpush1.msra.mxu0 0.0
    %52 = vmatprep.subr.mxu0 0.0
    %53 = vmatpush1.msra.mxu0 0.0
    %54 = vmatprep.subr.mxu0 0.0
    %55 = vmatpush1.msra.mxu0 0.0
    %56 = vmatprep.subr.mxu0 0.0
    %57 = vmatpush1.msra.mxu0 0.0
    %58 = vmatprep.subr.mxu0 0.0
    %59 = vmatpush1.msra.mxu0 0.0
    %60 = vmatprep.subr.mxu0 0.0
    %61 = vmatpush1.msra.mxu0 0.0
    %62 = vmatprep.subr.mxu0 0.0
    %63 = vmatpush1.msra.mxu0 %v23
    %64 = vmatprep.subr.mxu0 0.0
    %65 = vmatpush1.msra.mxu0 %v22
    %66 = vmatprep.subr.mxu0 0.0
    %67 = vmatpush1.msra.mxu0 %v21
    %68 = vmatprep.subr.mxu0 0.0
    %69 = vmatpush1.msra.mxu0 %v20
    %70 = vmatprep.subr.mxu0 0.0
    %71 = vmatpush2.msra.mxu0 0.0
    %72 = vmatprep.subr.mxu0 0.0
    %73 = vmatpush2.msra.mxu0 0.0
    %74 = vmatprep.subr.mxu0 0.0
    %75 = vmatpush2.msra.mxu0 0.0
    %76 = vmatprep.subr.mxu0 0.0
    %77 = vmatpush2.msra.mxu0 0.0
    %78 = vmatprep.subr.mxu0 0.0
    %79 = vmatpush2.msra.mxu0 0.0
    %80 = vmatprep.subr.mxu0 0.0
    %81 = vmatpush2.msra.mxu0 0.0
    %82 = vmatprep.subr.mxu0 0.0
    %83 = vmatpush2.msra.mxu0 0.0
    %84 = vmatprep.subr.mxu0 0.0
    %85 = vmatpush2.msra.mxu0 0.0
    %86 = vmatprep.subr.mxu0 0.0
    %87 = vmatpush2.msra.mxu0 0.0
    %88 = vmatprep.subr.mxu0 0.0
    %89 = vmatpush2.msra.mxu0 0.0
    %90 = vmatprep.subr.mxu0 0.0
    %91 = vmatpush2.msra.mxu0 0.0
    %92 = vmatprep.subr.mxu0 0.0
    %93 = vmatpush2.msra.mxu0 0.0
    %94 = vmatprep.subr.mxu0 0.0
    %95 = vmatpush2.msra.mxu0 0.0
    %96 = vmatprep.subr.mxu0 0.0
    %97 = vmatpush2.msra.mxu0 0.0
    %98 = vmatprep.subr.mxu0 0.0
    %99 = vmatpush2.msra.mxu0 0.0
    %100 = vmatprep.subr.mxu0 0.0
    %101 = vmatpush2.msra.mxu0 0.0
    %102 = vmatprep.mubr.f32.mxu0 0.0
    %103 = vmatmul.mubr.f32.gmra.mxu0 %v33
    %v104 = vpop.f32.mrf.mxu0
    %v105 = vadd.f32 %v29, %v104
    %v106 = vpop.f32.mrf.mxu0
    %107 = vmatprep.mubr.f32.mxu0 0.0
    %108 = vmatmul.mubr.f32.gmra.mxu0 %v36
    %v109 = vpop.f32.mrf.mxu0
    %v110 = vadd.f32 %v29, %v109
    %v111 = vpop.f32.mrf.mxu0
    %112 = vdwg.mxu0
    %v113 = vmax.f32 %v105, 0.0
    %v114 = vmax.f32 %v110, 0.0
    %v115 = vld [vmem:[%s2] sm:$0xff]
    %v116 = vld [vmem:[%s2 + $0x8] sm:$0xff]
    %v117 = vld [vmem:[%s2 + $0x10] sm:$0xff]
    %v118 = vld [vmem:[%s2 + $0x18] sm:$0xff]
    %v119 = vld [vmem:[%s2 + $0x20] sm:$0xff]
    %v120 = vld [vmem:[%s2 + $0x28] sm:$0xff]
    %v121 = vld [vmem:[%s2 + $0x30] sm:$0xff]
    %v122 = vld [vmem:[%s2 + $0x38] sm:$0xff]
    %vm123 = vcmask 523264
    %v125 = vsel %vm123, %v113, 0
    %v128 = vsel %vm123, %v114, 0
    %130 = vmatprep.subr.mxu0 0.0
    %131 = vmatpush1.msra.mxu0 0.0
    %132 = vmatprep.subr.mxu0 0.0
    %133 = vmatpush1.msra.mxu0 0.0
    %134 = vmatprep.subr.mxu0 0.0
    %135 = vmatpush1.msra.mxu0 0.0
    %136 = vmatprep.subr.mxu0 0.0
    %137 = vmatpush1.msra.mxu0 0.0
    %138 = vmatprep.subr.mxu0 0.0
    %139 = vmatpush1.msra.mxu0 0.0
    %140 = vmatprep.subr.mxu0 0.0
    %141 = vmatpush1.msra.mxu0 0.0
    %142 = vmatprep.subr.mxu0 0.0
    %143 = vmatpush1.msra.mxu0 0.0
    %144 = vmatprep.subr.mxu0 0.0
    %145 = vmatpush1.msra.mxu0 0.0
    %146 = vmatprep.subr.mxu0 0.0
    %147 = vmatpush1.msra.mxu0 %v122
    %148 = vmatprep.subr.mxu0 0.0
    %149 = vmatpush1.msra.mxu0 %v121
    %150 = vmatprep.subr.mxu0 0.0
    %151 = vmatpush1.msra.mxu0 %v120
    %152 = vmatprep.subr.mxu0 0.0
    %153 = vmatpush1.msra.mxu0 %v119
    %154 = vmatprep.subr.mxu0 0.0
    %155 = vmatpush1.msra.mxu0 %v118
    %156 = vmatprep.subr.mxu0 0.0
    %157 = vmatpush1.msra.mxu0 %v117
    %158 = vmatprep.subr.mxu0 0.0
    %159 = vmatpush1.msra.mxu0 %v116
    %160 = vmatprep.subr.mxu0 0.0
    %161 = vmatpush1.msra.mxu0 %v115
    %162 = vmatprep.subr.mxu0 0.0
    %163 = vmatpush2.msra.mxu0 0.0
    %164 = vmatprep.subr.mxu0 0.0
    %165 = vmatpush2.msra.mxu0 0.0
    %166 = vmatprep.subr.mxu0 0.0
    %167 = vmatpush2.msra.mxu0 0.0
    %168 = vmatprep.subr.mxu0 0.0
    %169 = vmatpush2.msra.mxu0 0.0
    %170 = vmatprep.subr.mxu0 0.0
    %171 = vmatpush2.msra.mxu0 0.0
    %172 = vmatprep.subr.mxu0 0.0
    %173 = vmatpush2.msra.mxu0 0.0
    %174 = vmatprep.subr.mxu0 0.0
    %175 = vmatpush2.msra.mxu0 0.0
    %176 = vmatprep.subr.mxu0 0.0
    %177 = vmatpush2.msra.mxu0 0.0
    %178 = vmatprep.subr.mxu0 0.0
    %179 = vmatpush2.msra.mxu0 0.0
    %180 = vmatprep.subr.mxu0 0.0
    %181 = vmatpush2.msra.mxu0 0.0
    %182 = vmatprep.subr.mxu0 0.0
    %183 = vmatpush2.msra.mxu0 0.0
    %184 = vmatprep.subr.mxu0 0.0
    %185 = vmatpush2.msra.mxu0 0.0
    %186 = vmatprep.subr.mxu0 0.0
    %187 = vmatpush2.msra.mxu0 0.0
    %188 = vmatprep.subr.mxu0 0.0
    %189 = vmatpush2.msra.mxu0 0.0
    %190 = vmatprep.subr.mxu0 0.0
    %191 = vmatpush2.msra.mxu0 0.0
    %192 = vmatprep.subr.mxu0 0.0
    %193 = vmatpush2.msra.mxu0 0.0
    %194 = vmatprep.mubr.f32.mxu0 0.0
    %195 = vmatmul.mubr.f32.gmra.mxu0 %v125
    %v196 = vpop.f32.mrf.mxu0
    %v197 = vadd.f32 0.0, %v196
    %v198 = vpop.f32.mrf.mxu0
    %199 = vmatprep.mubr.f32.mxu0 0.0
    %200 = vmatmul.mubr.f32.gmra.mxu0 %v128
    %v201 = vpop.f32.mrf.mxu0
    %v202 = vadd.f32 0.0, %v201
    %v203 = vpop.f32.mrf.mxu0
    %204 = vdwg.mxu0
    %v205 = vsub.f32 %v18, %v197
    %v206 = vsub.f32 %v19, %v202
    %207 = vst.msk [vmem:[#allocation2] sm:$0xff] %vm31, %v205
    %208 = vst.msk [vmem:[#allocation2 + $0x8] sm:$0xff] %vm31, %v206
    // Predicated region
    $region18: #{tpu_custom_call.1} parent=1 // pred_check
      _
    $region19: #{tpu_custom_call.1} parent=1 // pred_check_branch
      %210 = sbr.rel (0) target = $region21
    $region20: #{tpu_custom_call.1} parent=1 // pred_region
      %s212 = ssub.s32 256, 256
      %213 = vsyncadd [#allocation3], %s212
      %s214 = sshll.u32 [#allocation2], 4
      %s215 = int_to_ptr.vmem [resolvable:$true] %s214
      %220 = dma.vmem_to_hbm [thread:$0]  %s215, 256, %s4, [#allocation3], 128, 128, 8
    $region21: #{tpu_custom_call.1} parent=1 // pred_fallthru
      _
    // Predicated region
    $region22: #{tpu_custom_call.1} parent=1 // pred_check
      _
    $region23: #{tpu_custom_call.1} parent=1 // pred_check_branch
      %222 = sbr.rel (0) target = $region25
    $region24: #{tpu_custom_call.1} parent=1 // pred_region
      %223 = dma.done [#allocation3], 256
    $region25: #{tpu_custom_call.1} parent=1 // pred_fallthru
      _
    %224 = vsyncpa [#allocation3], 1

</llo_original>
